<compile_context>
chip_gen: v6e
topology: v6e:2x2x1
jax: 0.10.0
libtpu: 0.0.40
codegen_flags: <defaults>
</compile_context>

<pallas_src>
import math
import functools

import jax
import jax.numpy as jnp
from jax.experimental import pallas as pl
from jax.experimental.pallas import tpu as pltpu


def _round_up(v, m):
    return (v + m - 1) // m * m


def _tpu_kind():
    try:
        return jax.devices()[0].device_kind.lower()
    except Exception:
        return ""


def _pick_tiles(n_p, f_in_p, f_out_p, adj_bytes, feat_bytes):
    """Pick (tm, tk, vmem_limit_bytes) for the current TPU generation."""
    kind = _tpu_kind()
    if "v7" in kind:                       # 64 MiB physical VMEM per TC, 3.2 TB/s
        cap, budget, limit_cap = 2048, 40 << 20, 56 << 20
    elif "v6" in kind:                     # 128 MiB physical, plenty of headroom
        cap, budget, limit_cap = 2048, 80 << 20, 110 << 20
    elif "v5" in kind:                     # near roofline already; just fit VMEM
        cap, budget, limit_cap = 512, 40 << 20, 100 << 20
    else:                                  # unknown backend: stay conservative
        cap, budget, limit_cap = 512, 24 << 20, 64 << 20

    # Tile sizes must divide n_p (which is only 128-aligned, to cap pad waste).
    m = n_p // 128
    tiles = sorted({d * 128 for d in range(1, m + 1)
                    if m % d == 0 and d * 128 <= cap}, reverse=True)
    if not tiles:
        tiles = [128]

    def usage(tm, tk):
        return (2 * tm * tk * adj_bytes            # A tile, double buffered
                + 2 * tk * f_in_p * feat_bytes     # X (contraction rows)
                + 2 * tm * f_in_p * feat_bytes     # X (self-loop rows)
                + 2 * f_in_p * f_out_p * feat_bytes  # W
                + 2 * tm * f_out_p * 4             # f32 output tile
                + tm * f_in_p * 4                  # f32 accumulator scratch
                + (1 << 20))                       # slack

    # Prefer the largest row tile (halves X re-streaming), then largest k tile.
    for tm in tiles:
        for tk in tiles:
            if usage(tm, tk) <= budget:
                lim = min(limit_cap, max(32 << 20, int(usage(tm, tk) * 1.25)))
                return tm, tk, lim
    tm = tk = tiles[-1]
    return tm, tk, min(limit_cap, max(32 << 20, int(usage(tm, tk) * 1.25)))


def gcn_kernel(adj_ref, xk_ref, xi_ref, w_ref, b_ref, out_ref, acc_ref,
               *, deg_col, compute_dtype):
    """One (row_tile i, k_tile k) grid step.

    adj_ref : (tm, tk)          adjacency tile A[i, k]   (int8 / bf16 / f32)
    xk_ref  : (tk, F_in_p)      features (contraction rows), col `deg_col` == 1
    xi_ref  : (tm, F_in_p)      features (self-loop rows)
    w_ref   : (F_in_p, F_out_p) weights (rows >= F_in are zero)
    b_ref   : (1, F_out_p)      bias (f32)
    out_ref : (tm, F_out_p)     resident across k (accumulator-style output)
    acc_ref : (tm, F_in_p) f32  running (A + I) @ [X | 1]
    """
    k = pl.program_id(1)

    @pl.when(k == 0)
    def _():
        # Self-loop fold: acc starts as I @ [X | 1] == this tile's own X rows.
        acc_ref[...] = xi_ref[...].astype(jnp.float32)

    # Widen the narrow stored adjacency in-register (hides under the DMA).
    adj = adj_ref[...].astype(compute_dtype)
    acc_ref[...] += jnp.dot(adj, xk_ref[...],
                            preferred_element_type=jnp.float32)

    @pl.when(k == pl.num_programs(1) - 1)
    def _():
        acc = acc_ref[...]
        # Degree (incl. self-loop) was computed by the MXU in the ones-column.
        deg = acc[:, deg_col:deg_col + 1]
        # Real rows always have deg >= 1 (self-loop); clamp only protects the
        # zero padded rows (which are sliced off by the wrapper anyway).
        deg = jnp.maximum(deg, 1.0)
        inv = pl.reciprocal(deg, approx=False)       # EUP slot, off the VPU path
        # diag(inv) @ (A+I) @ X  ==  inv * acc   (padded W rows zero out deg col)
        h = (inv * acc).astype(w_ref.dtype)
        out = jnp.dot(h, w_ref[...], preferred_element_type=jnp.float32)
        out_ref[...] = (out + b_ref[...].astype(jnp.float32)).astype(out_ref.dtype)


@functools.partial(jax.jit, static_argnames=("adj_dtype", "compute_dtype"))
def graph_convolution(x, adj, weight, bias, *,
                      adj_dtype=jnp.int8, compute_dtype=jnp.bfloat16):
    """Fused GCN layer.  x:(N,F_in)  adj:(N,N)  weight:(F_in,F_out)  bias:(F_out,)

    adj_dtype     : storage dtype of the adjacency stream.  int8 (default) is
                    exact for 0/1 adjacencies and cuts the dominant HBM traffic
                    4x; pass jnp.bfloat16 / jnp.float32 for weighted graphs.
    compute_dtype : MXU operand dtype for X / W / widened A (accumulation is
                    always f32).  bf16 (default) runs at native MXU rate; pass
                    jnp.float32 for bit-for-bit-ish matching of the reference.
    """
    n, f_in = x.shape
    f_out = weight.shape[1]
    compute_dtype = jnp.dtype(compute_dtype)

    # ---- layout plumbing -----------------------------------------------------
    n_p = _round_up(n, 128)                      # fine-grained node padding
    f_in_p = _round_up(f_in + 1, 128)            # +1 spare lane for the degree
    f_out_p = _round_up(f_out, 128)
    deg_col = f_in

    tm, tk, vmem_limit = _pick_tiles(
        n_p, f_in_p, f_out_p,
        jnp.dtype(adj_dtype).itemsize, compute_dtype.itemsize)

    # Cast to the narrow storage dtype BEFORE padding (single fused HBM pass);
    # skip the pad entirely when N is already 128-aligned.
    adj_c = adj.astype(adj_dtype)
    if n_p != n:
        adj_c = jnp.pad(adj_c, ((0, n_p - n), (0, n_p - n)))

    # Features with a ones-column appended so the MXU computes rowsum(A) for free.
    x_aug = jnp.concatenate(
        [x.astype(compute_dtype), jnp.ones((n, 1), compute_dtype)], axis=1)
    x_p = jnp.pad(x_aug, ((0, n_p - n), (0, f_in_p - f_in - 1)))

    w_p = jnp.pad(weight.astype(compute_dtype),
                  ((0, f_in_p - f_in), (0, f_out_p - f_out)))
    b_p = jnp.pad(bias.reshape(1, -1).astype(jnp.float32),
                  ((0, 0), (0, f_out_p - f_out)))

    grid = (n_p // tm, n_p // tk)
    kernel = functools.partial(gcn_kernel, deg_col=deg_col,
                               compute_dtype=compute_dtype)

    out_p = pl.pallas_call(
        kernel,
        out_shape=jax.ShapeDtypeStruct((n_p, f_out_p), jnp.float32),
        grid_spec=pltpu.PrefetchScalarGridSpec(
            num_scalar_prefetch=0,
            grid=grid,
            in_specs=[
                pl.BlockSpec((tm, tk), lambda i, k: (i, k)),           # A tile
                pl.BlockSpec((tk, f_in_p), lambda i, k: (k, 0)),       # X (contract)
                pl.BlockSpec((tm, f_in_p), lambda i, k: (i, 0)),       # X (self rows)
                pl.BlockSpec((f_in_p, f_out_p), lambda i, k: (0, 0)),  # W
                pl.BlockSpec((1, f_out_p), lambda i, k: (0, 0)),       # bias
            ],
            out_specs=pl.BlockSpec((tm, f_out_p), lambda i, k: (i, 0)),
            scratch_shapes=[
                pltpu.VMEM((tm, f_in_p), jnp.float32),   # (A+I) @ [X|1] accumulator
            ],
        ),
        compiler_params=pltpu.CompilerParams(
            dimension_semantics=("parallel", "arbitrary"),
            vmem_limit_bytes=int(vmem_limit)),
    )(adj_c, x_p, x_p, w_p, b_p)

    return out_p[:n, :f_out]


def reference(x, adj, weight, bias):
    n = adj.shape[0]
    a = adj + jnp.eye(n, dtype=jnp.float32)
    t = 1.0 / jnp.sum(a, axis=1)
    t = jnp.where(jnp.isnan(t), 0.0, t)
    a = jnp.diag(t) @ a
    return a @ (x @ weight) + bias


if __name__ == "__main__":
    # Small shapes implied by the module: N nodes, in_features -> out_features.
    N, F_IN, F_OUT = 8, 16, 32

    key = jax.random.PRNGKey(0)
    k_adj, k_x, k_w, k_b = jax.random.split(key, 4)

    # Parameters mimicking reset_parameters(): uniform(-stdv, stdv), stdv=1/sqrt(F_out)
    stdv = 1.0 / math.sqrt(F_OUT)
    weight = jax.random.uniform(k_w, (F_IN, F_OUT), jnp.float32, -stdv, stdv)
    bias = jax.random.uniform(k_b, (F_OUT,), jnp.float32, -stdv, stdv)

    # Node features and a symmetric 0/1 adjacency matrix.
    x = jax.random.normal(k_x, (N, F_IN), jnp.float32)
    adj_raw = (jax.random.uniform(k_adj, (N, N)) > 0.5).astype(jnp.float32)
    adj = jnp.maximum(adj_raw, adj_raw.T)

    ref = reference(x, adj, weight, bias)

    # Fast path (defaults): int8-stored adjacency (exact for 0/1), bf16 MXU operands.
    out_fast = jax.block_until_ready(graph_convolution(x, adj, weight, bias))
    # Exact path: f32 everywhere (matches the torch reference to float tolerance).
    out_exact = jax.block_until_ready(
        graph_convolution(x, adj, weight, bias,
                          adj_dtype=jnp.float32, compute_dtype=jnp.float32))

    assert out_fast.shape == (N, F_OUT)
    assert out_exact.shape == (N, F_OUT)
    assert jnp.allclose(out_exact, ref, atol=1e-4, rtol=1e-4)
    assert jnp.allclose(out_fast, ref, atol=2e-2, rtol=2e-2)

    print("KERNEL_OK")
</pallas_src>

<mosaic_0001>
module attributes {stable_mosaic.version = 11 : i64} {
  func.func @gcn_kernel(%arg0: i32, %arg1: i32, %arg2: memref<128x128xi8, #tpu.memory_space<vmem>>, %arg3: memref<128x128xbf16, #tpu.memory_space<vmem>>, %arg4: memref<128x128xbf16, #tpu.memory_space<vmem>>, %arg5: memref<128x128xbf16, #tpu.memory_space<vmem>>, %arg6: memref<1x128xf32, #tpu.memory_space<vmem>>, %arg7: memref<128x128xf32, #tpu.memory_space<vmem>>, %arg8: memref<128x128xf32, #tpu.memory_space<vmem>>) attributes {dimension_semantics = [#tpu.dimension_semantics<parallel>, #tpu.dimension_semantics<arbitrary>], iteration_bounds = array<i64: 1, 1>, scalar_prefetch = 0 : i64, scratch_operands = 1 : i64, tpu.core_type = #tpu.core_type<tc>, window_params = [{transform_indices = @transform_0, window_bounds = array<i64: 128, 128>}, {transform_indices = @transform_1, window_bounds = array<i64: 128, 128>}, {transform_indices = @transform_2, window_bounds = array<i64: 128, 128>}, {pipeline_mode = #tpu.pipeline_mode<synchronous>, transform_indices = @transform_3, window_bounds = array<i64: 128, 128>}, {pipeline_mode = #tpu.pipeline_mode<synchronous>, transform_indices = @transform_4, window_bounds = array<i64: 1, 128>}, {transform_indices = @transform_5, window_bounds = array<i64: 128, 128>}]} {
    %c0_i32 = arith.constant 0 : i32
    %0 = arith.cmpi eq, %arg1, %c0_i32 : i32
    %1 = arith.extui %0 : i1 to i32
    %c0_i32_0 = arith.constant 0 : i32
    %2 = arith.cmpi ne, %1, %c0_i32_0 : i32
    scf.if %2 {
      %c0_10 = arith.constant 0 : index
      %c0_11 = arith.constant 0 : index
      %13 = vector.load %arg4[%c0_10, %c0_11] : memref<128x128xbf16, #tpu.memory_space<vmem>>, vector<128x128xbf16>
      %14 = arith.extf %13 : vector<128x128xbf16> to vector<128x128xf32>
      %c0_12 = arith.constant 0 : index
      %c0_13 = arith.constant 0 : index
      %15 = vector.load %arg8[%c0_12, %c0_13] : memref<128x128xf32, #tpu.memory_space<vmem>>, vector<128x128xf32>
      tpu.vector_store %arg8[%c0_12, %c0_13], %14 {strides = array<i32>} : memref<128x128xf32, #tpu.memory_space<vmem>>, vector<128x128xf32>,
    } else {
    }
    %c0 = arith.constant 0 : index
    %c0_1 = arith.constant 0 : index
    %3 = vector.load %arg2[%c0, %c0_1] : memref<128x128xi8, #tpu.memory_space<vmem>>, vector<128x128xi8>
    %4 = arith.sitofp %3 : vector<128x128xi8> to vector<128x128xbf16>
    %c0_2 = arith.constant 0 : index
    %c0_3 = arith.constant 0 : index
    %5 = vector.load %arg8[%c0_2, %c0_3] : memref<128x128xf32, #tpu.memory_space<vmem>>, vector<128x128xf32>
    %c0_4 = arith.constant 0 : index
    %c0_5 = arith.constant 0 : index
    %6 = vector.load %arg3[%c0_4, %c0_5] : memref<128x128xbf16, #tpu.memory_space<vmem>>, vector<128x128xbf16>
    %cst = arith.constant dense<0.000000e+00> : vector<128x128xf32>
    %7 = tpu.matmul %4, %6, %cst {dimension_numbers = #tpu.dot_dimension_numbers<[1], [0], [0], [1], [0, 0, 1, 1], [], []>} : vector<128x128xbf16>, vector<128x128xbf16>, vector<128x128xf32> -> vector<128x128xf32>
    %8 = arith.addf %5, %7 : vector<128x128xf32>
    %c0_6 = arith.constant 0 : index
    %c0_7 = arith.constant 0 : index
    %9 = vector.load %arg8[%c0_6, %c0_7] : memref<128x128xf32, #tpu.memory_space<vmem>>, vector<128x128xf32>
    tpu.vector_store %arg8[%c0_6, %c0_7], %8 {strides = array<i32>} : memref<128x128xf32, #tpu.memory_space<vmem>>, vector<128x128xf32>,
    %c0_i32_8 = arith.constant 0 : i32
    %10 = arith.cmpi eq, %arg1, %c0_i32_8 : i32
    %11 = arith.extui %10 : i1 to i32
    %c0_i32_9 = arith.constant 0 : i32
    %12 = arith.cmpi ne, %11, %c0_i32_9 : i32
    scf.if %12 {
      %c0_10 = arith.constant 0 : index
      %c0_11 = arith.constant 0 : index
      %13 = vector.load %arg8[%c0_10, %c0_11] : memref<128x128xf32, #tpu.memory_space<vmem>>, vector<128x128xf32>
      %14 = vector.extract_strided_slice %13 {offsets = [0, 16], sizes = [128, 1], strides = [1, 1]} : vector<128x128xf32> to vector<128x1xf32>
      %cst_12 = arith.constant 1.000000e+00 : f32
      %15 = vector.broadcast %cst_12 : f32 to vector<128x1xf32>
      %16 = arith.maximumf %14, %15 : vector<128x1xf32>
      %17 = tpu.reciprocal %16 : vector<128x1xf32> -> vector<128x1xf32>
      %18 = vector.broadcast %17 : vector<128x1xf32> to vector<128x128xf32>
      %19 = arith.mulf %18, %13 : vector<128x128xf32>
      %20 = arith.truncf %19 : vector<128x128xf32> to vector<128x128xbf16>
      %c0_13 = arith.constant 0 : index
      %c0_14 = arith.constant 0 : index
      %21 = vector.load %arg5[%c0_13, %c0_14] : memref<128x128xbf16, #tpu.memory_space<vmem>>, vector<128x128xbf16>
      %cst_15 = arith.constant dense<0.000000e+00> : vector<128x128xf32>
      %22 = tpu.matmul %20, %21, %cst_15 {dimension_numbers = #tpu.dot_dimension_numbers<[1], [0], [0], [1], [0, 0, 1, 1], [], []>} : vector<128x128xbf16>, vector<128x128xbf16>, vector<128x128xf32> -> vector<128x128xf32>
      %c0_16 = arith.constant 0 : index
      %c0_17 = arith.constant 0 : index
      %23 = vector.load %arg6[%c0_16, %c0_17] : memref<1x128xf32, #tpu.memory_space<vmem>>, vector<1x128xf32>
      %24 = vector.broadcast %23 : vector<1x128xf32> to vector<128x128xf32>
      %25 = arith.addf %22, %24 : vector<128x128xf32>
      %c0_18 = arith.constant 0 : index
      %c0_19 = arith.constant 0 : index
      %26 = vector.load %arg7[%c0_18, %c0_19] : memref<128x128xf32, #tpu.memory_space<vmem>>, vector<128x128xf32>
      tpu.vector_store %arg7[%c0_18, %c0_19], %25 {strides = array<i32>} : memref<128x128xf32, #tpu.memory_space<vmem>>, vector<128x128xf32>,
    } else {
    }
    return
  }
  func.func @transform_0(%arg0: i32, %arg1: i32) -> (i32, i32) {
    %c0_i32 = arith.constant 0 : i32
    return %arg0, %arg1 : i32, i32
  }
  func.func @transform_1(%arg0: i32, %arg1: i32) -> (i32, i32) {
    %c0_i32 = arith.constant 0 : i32
    %c0_i32_0 = arith.constant 0 : i32
    return %arg1, %c0_i32 : i32, i32
  }
  func.func @transform_2(%arg0: i32, %arg1: i32) -> (i32, i32) {
    %c0_i32 = arith.constant 0 : i32
    %c0_i32_0 = arith.constant 0 : i32
    return %arg0, %c0_i32 : i32, i32
  }
  func.func @transform_3(%arg0: i32, %arg1: i32) -> (i32, i32) {
    %c0_i32 = arith.constant 0 : i32
    %c0_i32_0 = arith.constant 0 : i32
    %c0_i32_1 = arith.constant 0 : i32
    return %c0_i32, %c0_i32_0 : i32, i32
  }
  func.func @transform_4(%arg0: i32, %arg1: i32) -> (i32, i32) {
    %c0_i32 = arith.constant 0 : i32
    %c0_i32_0 = arith.constant 0 : i32
    %c0_i32_1 = arith.constant 0 : i32
    return %c0_i32, %c0_i32_0 : i32, i32
  }
  func.func @transform_5(%arg0: i32, %arg1: i32) -> (i32, i32) {
    %c0_i32 = arith.constant 0 : i32
    %c0_i32_0 = arith.constant 0 : i32
    return %arg0, %c0_i32 : i32, i32
  }
}

</mosaic_0001>

<llo_original>
// kernel: graph_convolution.1
$region0: #{graph_convolution.1}
  #allocation0 [shape = 'u32[]', space=smem, size = 0x4, offset = 0x4, fixed_abs, tag = 'smem constant byte address 0x4 - core index']
  #allocation1 [shape = 'u32[144,128]{1,0:T(1,128)}', space=vmem, size = 0x12000, scoped, tag = 'internal scratch']
  #allocation2 [shape = 'f32[128,128]{1,0:T(8,128)}', space=vmem, size = 0x10000, scoped, tag = 'scratch operand']
  %s0 = inlined_call_operand.vmem [shape: s8[128,128], index: 0, kind: input, shape index: {}]
  %s1 = inlined_call_operand.vmem [shape: bf16[128,128], index: 1, kind: input, shape index: {}, may-alias: {1,2}]
  %s2 = inlined_call_operand.vmem [shape: bf16[128,128], index: 2, kind: input, shape index: {}, may-alias: {1,2}]
  %s3 = inlined_call_operand.vmem [shape: bf16[128,128], index: 3, kind: input, shape index: {}]
  %s4 = inlined_call_operand.vmem [shape: f32[1,128], index: 4, kind: input, shape index: {}]
  %s5 = inlined_call_operand.vmem [shape: f32[128,128], index: 5, kind: output, shape index: {}]
  %s6 = sld [smem:[#allocation0]]
  $region38: #{graph_convolution.1} parent=0
    _
  %s8 = ssub.s32 1, %s6
  %s9 = scalar_select 0, %s8, %s6
  // Predicated region
  $region2: #{graph_convolution.1} parent=0 // pred_check
    _
  $region3: #{graph_convolution.1} parent=0 // pred_check_branch
    %11 = sbr.rel (0) target = $region5
  $region4: #{graph_convolution.1} parent=0 // pred_region
    _
  $region5: #{graph_convolution.1} parent=0 // pred_fallthru
    _
  // Predicated region
  $region6: #{graph_convolution.1} parent=0 // pred_check
    _
  $region7: #{graph_convolution.1} parent=0 // pred_check_branch
    %13 = sbr.rel (0) target = $region9
  $region8: #{graph_convolution.1} parent=0 // pred_region
    _
  $region9: #{graph_convolution.1} parent=0 // pred_fallthru
    _
  // Predicated region
  $region10: #{graph_convolution.1} parent=0 // pred_check
    _
  $region11: #{graph_convolution.1} parent=0 // pred_check_branch
    %15 = sbr.rel (0) target = $region13
  $region12: #{graph_convolution.1} parent=0 // pred_region
    _
  $region13: #{graph_convolution.1} parent=0 // pred_fallthru
    _
  // Predicated region
  $region14: #{graph_convolution.1} parent=0 // pred_check
    _
  $region15: #{graph_convolution.1} parent=0 // pred_check_branch
    %17 = sbr.rel (0) target = $region17
  $region16: #{graph_convolution.1} parent=0 // pred_region
    _
  $region17: #{graph_convolution.1} parent=0 // pred_fallthru
    _
  // Predicated region
  $region18: #{graph_convolution.1} parent=0 // pred_check
    _
  $region19: #{graph_convolution.1} parent=0 // pred_check_branch
    %19 = sbr.rel (0) target = $region21
  $region20: #{graph_convolution.1} parent=0 // pred_region
    _
  $region21: #{graph_convolution.1} parent=0 // pred_fallthru
    _
  %p21 = scmp.eq.s32.totalorder 0, 0
  // Predicated region
  $region22: #{graph_convolution.1} parent=0 // pred_check
    %p22 = pneg %p21
  $region23: #{graph_convolution.1} parent=0 // pred_check_branch
    %24 = sbr.rel (%p22) target = $region25
  $region24: #{graph_convolution.1} parent=0 // pred_region
    %v25 = vld [vmem:[%s2] sm:$0xf]
    %v26 = vld [vmem:[%s2 + $0x4] sm:$0xf]
    %v27 = vld [vmem:[%s2 + $0x8] sm:$0xf]
    %v28 = vld [vmem:[%s2 + $0xc] sm:$0xf]
    %v29 = vld [vmem:[%s2 + $0x10] sm:$0xf]
    %v30 = vld [vmem:[%s2 + $0x14] sm:$0xf]
    %v31 = vld [vmem:[%s2 + $0x18] sm:$0xf]
    %v32 = vld [vmem:[%s2 + $0x1c] sm:$0xf]
    %v33 = vld [vmem:[%s2 + $0x20] sm:$0xf]
    %v34 = vld [vmem:[%s2 + $0x24] sm:$0xf]
    %v35 = vld [vmem:[%s2 + $0x28] sm:$0xf]
    %v36 = vld [vmem:[%s2 + $0x2c] sm:$0xf]
    %v37 = vld [vmem:[%s2 + $0x30] sm:$0xf]
    %v38 = vld [vmem:[%s2 + $0x34] sm:$0xf]
    %v39 = vld [vmem:[%s2 + $0x38] sm:$0xf]
    %v40 = vld [vmem:[%s2 + $0x3c] sm:$0xf]
    %v41 = vunpack.c.l.bf16 %v25
    %v42 = vunpack.c.l.bf16 %v26
    %v43 = vunpack.c.l.bf16 %v27
    %v44 = vunpack.c.l.bf16 %v28
    %v45 = vunpack.c.l.bf16 %v29
    %v46 = vunpack.c.l.bf16 %v30
    %v47 = vunpack.c.l.bf16 %v31
    %v48 = vunpack.c.l.bf16 %v32
    %v49 = vunpack.c.l.bf16 %v33
    %v50 = vunpack.c.l.bf16 %v34
    %v51 = vunpack.c.l.bf16 %v35
    %v52 = vunpack.c.l.bf16 %v36
    %v53 = vunpack.c.l.bf16 %v37
    %v54 = vunpack.c.l.bf16 %v38
    %v55 = vunpack.c.l.bf16 %v39
    %v56 = vunpack.c.l.bf16 %v40
    %57 = vst [vmem:[#allocation2] sm:$0xff] %v41
    %58 = vst [vmem:[#allocation2 + $0x8] sm:$0xff] %v42
    %59 = vst [vmem:[#allocation2 + $0x10] sm:$0xff] %v43
    %60 = vst [vmem:[#allocation2 + $0x18] sm:$0xff] %v44
    %61 = vst [vmem:[#allocation2 + $0x20] sm:$0xff] %v45
    %62 = vst [vmem:[#allocation2 + $0x28] sm:$0xff] %v46
    %63 = vst [vmem:[#allocation2 + $0x30] sm:$0xff] %v47
    %64 = vst [vmem:[#allocation2 + $0x38] sm:$0xff] %v48
    %65 = vst [vmem:[#allocation2 + $0x40] sm:$0xff] %v49
    %66 = vst [vmem:[#allocation2 + $0x48] sm:$0xff] %v50
    %67 = vst [vmem:[#allocation2 + $0x50] sm:$0xff] %v51
    %68 = vst [vmem:[#allocation2 + $0x58] sm:$0xff] %v52
    %69 = vst [vmem:[#allocation2 + $0x60] sm:$0xff] %v53
    %70 = vst [vmem:[#allocation2 + $0x68] sm:$0xff] %v54
    %71 = vst [vmem:[#allocation2 + $0x70] sm:$0xff] %v55
    %72 = vst [vmem:[#allocation2 + $0x78] sm:$0xff] %v56
  $region25: #{graph_convolution.1} parent=0 // pred_fallthru
    _
  %v73 = vld [vmem:[%s0] sm:$0xff]
  %v74 = vld [vmem:[%s0 + $0x8] sm:$0xff]
  %v75 = vld [vmem:[%s0 + $0x10] sm:$0xff]
  %v76 = vld [vmem:[%s0 + $0x18] sm:$0xff]
  %v77 = vunpack.c.l.s8.bf16 %v73
  %v78 = vunpack.c.h.s8.bf16 %v73
  %v79 = vunpack.c.l.s8.bf16 %v74
  %v80 = vunpack.c.h.s8.bf16 %v74
  %v81 = vunpack.c.l.s8.bf16 %v75
  %v82 = vunpack.c.h.s8.bf16 %v75
  %v83 = vunpack.c.l.s8.bf16 %v76
  %v84 = vunpack.c.h.s8.bf16 %v76
  %v85 = vld [vmem:[#allocation2] sm:$0xff]
  %v86 = vld [vmem:[#allocation2 + $0x8] sm:$0xff]
  %v87 = vld [vmem:[#allocation2 + $0x10] sm:$0xff]
  %v88 = vld [vmem:[#allocation2 + $0x18] sm:$0xff]
  %v89 = vld [vmem:[#allocation2 + $0x20] sm:$0xff]
  %v90 = vld [vmem:[#allocation2 + $0x28] sm:$0xff]
  %v91 = vld [vmem:[#allocation2 + $0x30] sm:$0xff]
  %v92 = vld [vmem:[#allocation2 + $0x38] sm:$0xff]
  %v93 = vld [vmem:[#allocation2 + $0x40] sm:$0xff]
  %v94 = vld [vmem:[#allocation2 + $0x48] sm:$0xff]
  %v95 = vld [vmem:[#allocation2 + $0x50] sm:$0xff]
  %v96 = vld [vmem:[#allocation2 + $0x58] sm:$0xff]
  %v97 = vld [vmem:[#allocation2 + $0x60] sm:$0xff]
  %v98 = vld [vmem:[#allocation2 + $0x68] sm:$0xff]
  %v99 = vld [vmem:[#allocation2 + $0x70] sm:$0xff]
  %v100 = vld [vmem:[#allocation2 + $0x78] sm:$0xff]
  %v101 = vld [vmem:[%s1] sm:$0xf]
  %v102 = vld [vmem:[%s1 + $0x4] sm:$0xf]
  %v103 = vld [vmem:[%s1 + $0x8] sm:$0xf]
  %v104 = vld [vmem:[%s1 + $0xc] sm:$0xf]
  %v105 = vld [vmem:[%s1 + $0x10] sm:$0xf]
  %v106 = vld [vmem:[%s1 + $0x14] sm:$0xf]
  %v107 = vld [vmem:[%s1 + $0x18] sm:$0xf]
  %v108 = vld [vmem:[%s1 + $0x1c] sm:$0xf]
  %v109 = vld [vmem:[%s1 + $0x20] sm:$0xf]
  %v110 = vld [vmem:[%s1 + $0x24] sm:$0xf]
  %v111 = vld [vmem:[%s1 + $0x28] sm:$0xf]
  %v112 = vld [vmem:[%s1 + $0x2c] sm:$0xf]
  %v113 = vld [vmem:[%s1 + $0x30] sm:$0xf]
  %v114 = vld [vmem:[%s1 + $0x34] sm:$0xf]
  %v115 = vld [vmem:[%s1 + $0x38] sm:$0xf]
  %v116 = vld [vmem:[%s1 + $0x3c] sm:$0xf]
  %v133 = vunpack.c.l.b16 %v101
  %v134 = vunpack.c.l.b16 %v102
  %v135 = vunpack.c.l.b16 %v103
  %v136 = vunpack.c.l.b16 %v104
  %v137 = vunpack.c.l.b16 %v105
  %v138 = vunpack.c.l.b16 %v106
  %v139 = vunpack.c.l.b16 %v107
  %v140 = vunpack.c.l.b16 %v108
  %v141 = vunpack.c.l.b16 %v109
  %v142 = vunpack.c.l.b16 %v110
  %v143 = vunpack.c.l.b16 %v111
  %v144 = vunpack.c.l.b16 %v112
  %v145 = vunpack.c.l.b16 %v113
  %v146 = vunpack.c.l.b16 %v114
  %v147 = vunpack.c.l.b16 %v115
  %v148 = vunpack.c.l.b16 %v116
  %v149 = vpack.c.b16 %v134, %v133
  %v150 = vpack.c.b16 %v136, %v135
  %v151 = vpack.c.b16 %v138, %v137
  %v152 = vpack.c.b16 %v140, %v139
  %v153 = vpack.c.b16 %v142, %v141
  %v154 = vpack.c.b16 %v144, %v143
  %v155 = vpack.c.b16 %v146, %v145
  %v156 = vpack.c.b16 %v148, %v147
  %165 = vmatprep.subr.bf16.mxu0 0
  %166 = vmatpush1.bf16.msra.mxu0 %v156
  %167 = vmatprep.subr.bf16.mxu0 0
  %168 = vmatpush1.bf16.msra.mxu0 %v155
  %169 = vmatprep.subr.bf16.mxu0 0
  %170 = vmatpush1.bf16.msra.mxu0 %v154
  %171 = vmatprep.subr.bf16.mxu0 0
  %172 = vmatpush1.bf16.msra.mxu0 %v153
  %173 = vmatprep.subr.bf16.mxu0 0
  %174 = vmatpush1.bf16.msra.mxu0 %v152
  %175 = vmatprep.subr.bf16.mxu0 0
  %176 = vmatpush1.bf16.msra.mxu0 %v151
  %177 = vmatprep.subr.bf16.mxu0 0
  %178 = vmatpush1.bf16.msra.mxu0 %v150
  %179 = vmatprep.subr.bf16.mxu0 0
  %180 = vmatpush1.bf16.msra.mxu0 %v149
  %181 = vmatprep.subr.bf16.mxu0 0
  %182 = vmatpush2.bf16.msra.mxu0 0
  %183 = vmatprep.subr.bf16.mxu0 0
  %184 = vmatpush2.bf16.msra.mxu0 0
  %185 = vmatprep.subr.bf16.mxu0 0
  %186 = vmatpush2.bf16.msra.mxu0 0
  %187 = vmatprep.subr.bf16.mxu0 0
  %188 = vmatpush2.bf16.msra.mxu0 0
  %189 = vmatprep.subr.bf16.mxu0 0
  %190 = vmatpush2.bf16.msra.mxu0 0
  %191 = vmatprep.subr.bf16.mxu0 0
  %192 = vmatpush2.bf16.msra.mxu0 0
  %193 = vmatprep.subr.bf16.mxu0 0
  %194 = vmatpush2.bf16.msra.mxu0 0
  %195 = vmatprep.subr.bf16.mxu0 0
  %196 = vmatpush2.bf16.msra.mxu0 0
  %197 = vmatprep.mubr.bf16.mxu0 0
  %198 = vmatmul.mubr.bf16.gmra.mxu0 %v77
  %v199 = vpop.f32.mrf.mxu0
  %v200 = vadd.f32 0.0, %v199
  %v201 = vpop.f32.mrf.mxu0
  %v202 = vpop.f32.mrf.mxu0
  %v203 = vadd.f32 0.0, %v202
  %v204 = vpop.f32.mrf.mxu0
  %205 = vmatprep.mubr.bf16.mxu0 0
  %206 = vmatmul.mubr.bf16.gmra.mxu0 %v78
  %v207 = vpop.f32.mrf.mxu0
  %v208 = vadd.f32 0.0, %v207
  %v209 = vpop.f32.mrf.mxu0
  %v210 = vpop.f32.mrf.mxu0
  %v211 = vadd.f32 0.0, %v210
  %v212 = vpop.f32.mrf.mxu0
  %213 = vmatprep.mubr.bf16.mxu0 0
  %214 = vmatmul.mubr.bf16.gmra.mxu0 %v79
  %v215 = vpop.f32.mrf.mxu0
  %v216 = vadd.f32 0.0, %v215
  %v217 = vpop.f32.mrf.mxu0
  %v218 = vpop.f32.mrf.mxu0
  %v219 = vadd.f32 0.0, %v218
  %v220 = vpop.f32.mrf.mxu0
  %221 = vmatprep.mubr.bf16.mxu0 0
  %222 = vmatmul.mubr.bf16.gmra.mxu0 %v80
  %v223 = vpop.f32.mrf.mxu0
  %v224 = vadd.f32 0.0, %v223
  %v225 = vpop.f32.mrf.mxu0
  %v226 = vpop.f32.mrf.mxu0
  %v227 = vadd.f32 0.0, %v226
  %v228 = vpop.f32.mrf.mxu0
  %229 = vmatprep.mubr.bf16.mxu0 0
  %230 = vmatmul.mubr.bf16.gmra.mxu0 %v81
  %v231 = vpop.f32.mrf.mxu0
  %v232 = vadd.f32 0.0, %v231
  %v233 = vpop.f32.mrf.mxu0
  %v234 = vpop.f32.mrf.mxu0
  %v235 = vadd.f32 0.0, %v234
  %v236 = vpop.f32.mrf.mxu0
  %237 = vmatprep.mubr.bf16.mxu0 0
  %238 = vmatmul.mubr.bf16.gmra.mxu0 %v82
  %v239 = vpop.f32.mrf.mxu0
  %v240 = vadd.f32 0.0, %v239
  %v241 = vpop.f32.mrf.mxu0
  %v242 = vpop.f32.mrf.mxu0
  %v243 = vadd.f32 0.0, %v242
  %v244 = vpop.f32.mrf.mxu0
  %245 = vmatprep.mubr.bf16.mxu0 0
  %246 = vmatmul.mubr.bf16.gmra.mxu0 %v83
  %v247 = vpop.f32.mrf.mxu0
  %v248 = vadd.f32 0.0, %v247
  %v249 = vpop.f32.mrf.mxu0
  %v250 = vpop.f32.mrf.mxu0
  %v251 = vadd.f32 0.0, %v250
  %v252 = vpop.f32.mrf.mxu0
  %253 = vmatprep.mubr.bf16.mxu0 0
  %254 = vmatmul.mubr.bf16.gmra.mxu0 %v84
  %v255 = vpop.f32.mrf.mxu0
  %v256 = vadd.f32 0.0, %v255
  %v257 = vpop.f32.mrf.mxu0
  %v258 = vpop.f32.mrf.mxu0
  %v259 = vadd.f32 0.0, %v258
  %v260 = vpop.f32.mrf.mxu0
  %261 = vdwg.mxu0
  %v262 = vadd.f32 %v85, %v200
  %v263 = vadd.f32 %v86, %v203
  %v264 = vadd.f32 %v87, %v208
  %v265 = vadd.f32 %v88, %v211
  %v266 = vadd.f32 %v89, %v216
  %v267 = vadd.f32 %v90, %v219
  %v268 = vadd.f32 %v91, %v224
  %v269 = vadd.f32 %v92, %v227
  %v270 = vadd.f32 %v93, %v232
  %v271 = vadd.f32 %v94, %v235
  %v272 = vadd.f32 %v95, %v240
  %v273 = vadd.f32 %v96, %v243
  %v274 = vadd.f32 %v97, %v248
  %v275 = vadd.f32 %v98, %v251
  %v276 = vadd.f32 %v99, %v256
  %v277 = vadd.f32 %v100, %v259
  %278 = vst [vmem:[#allocation2] sm:$0xff] %v262
  %279 = vst [vmem:[#allocation2 + $0x8] sm:$0xff] %v263
  %280 = vst [vmem:[#allocation2 + $0x10] sm:$0xff] %v264
  %281 = vst [vmem:[#allocation2 + $0x18] sm:$0xff] %v265
  %282 = vst [vmem:[#allocation2 + $0x20] sm:$0xff] %v266
  %283 = vst [vmem:[#allocation2 + $0x28] sm:$0xff] %v267
  %284 = vst [vmem:[#allocation2 + $0x30] sm:$0xff] %v268
  %285 = vst [vmem:[#allocation2 + $0x38] sm:$0xff] %v269
  %286 = vst [vmem:[#allocation2 + $0x40] sm:$0xff] %v270
  %287 = vst [vmem:[#allocation2 + $0x48] sm:$0xff] %v271
  %288 = vst [vmem:[#allocation2 + $0x50] sm:$0xff] %v272
  %289 = vst [vmem:[#allocation2 + $0x58] sm:$0xff] %v273
  %290 = vst [vmem:[#allocation2 + $0x60] sm:$0xff] %v274
  %291 = vst [vmem:[#allocation2 + $0x68] sm:$0xff] %v275
  %292 = vst [vmem:[#allocation2 + $0x70] sm:$0xff] %v276
  %293 = vst [vmem:[#allocation2 + $0x78] sm:$0xff] %v277
  // Predicated region
  $region26: #{graph_convolution.1} parent=0 // pred_check
    %p294 = pneg %p21
  $region27: #{graph_convolution.1} parent=0 // pred_check_branch
    %296 = sbr.rel (%p294) target = $region29
  $region28: #{graph_convolution.1} parent=0 // pred_region
    %v297 = vld [vmem:[#allocation2] sm:$0xff]
    %v298 = vld [vmem:[#allocation2 + $0x8] sm:$0xff]
    %v299 = vld [vmem:[#allocation2 + $0x10] sm:$0xff]
    %v300 = vld [vmem:[#allocation2 + $0x18] sm:$0xff]
    %v301 = vld [vmem:[#allocation2 + $0x20] sm:$0xff]
    %v302 = vld [vmem:[#allocation2 + $0x28] sm:$0xff]
    %v303 = vld [vmem:[#allocation2 + $0x30] sm:$0xff]
    %v304 = vld [vmem:[#allocation2 + $0x38] sm:$0xff]
    %v305 = vld [vmem:[#allocation2 + $0x40] sm:$0xff]
    %v306 = vld [vmem:[#allocation2 + $0x48] sm:$0xff]
    %v307 = vld [vmem:[#allocation2 + $0x50] sm:$0xff]
    %v308 = vld [vmem:[#allocation2 + $0x58] sm:$0xff]
    %v309 = vld [vmem:[#allocation2 + $0x60] sm:$0xff]
    %v310 = vld [vmem:[#allocation2 + $0x68] sm:$0xff]
    %v311 = vld [vmem:[#allocation2 + $0x70] sm:$0xff]
    %v312 = vld [vmem:[#allocation2 + $0x78] sm:$0xff]
    %v313 = vmax.f32 %v297, 1.0
    %v314 = vmax.f32 %v298, 1.0
    %v315 = vmax.f32 %v299, 1.0
    %v316 = vmax.f32 %v300, 1.0
    %v317 = vmax.f32 %v301, 1.0
    %v318 = vmax.f32 %v302, 1.0
    %v319 = vmax.f32 %v303, 1.0
    %v320 = vmax.f32 %v304, 1.0
    %v321 = vmax.f32 %v305, 1.0
    %v322 = vmax.f32 %v306, 1.0
    %v323 = vmax.f32 %v307, 1.0
    %v324 = vmax.f32 %v308, 1.0
    %v325 = vmax.f32 %v309, 1.0
    %v326 = vmax.f32 %v310, 1.0
    %v327 = vmax.f32 %v311, 1.0
    %v328 = vmax.f32 %v312, 1.0
    %v329 = vrcp.pop %v313
    %v330 = vrcp.pop %v314
    %v331 = vrcp.pop %v315
    %v332 = vrcp.pop %v316
    %v333 = vrcp.pop %v317
    %v334 = vrcp.pop %v318
    %v335 = vrcp.pop %v319
    %v336 = vrcp.pop %v320
    %v337 = vrcp.pop %v321
    %v338 = vrcp.pop %v322
    %v339 = vrcp.pop %v323
    %v340 = vrcp.pop %v324
    %v341 = vrcp.pop %v325
    %v342 = vrcp.pop %v326
    %v343 = vrcp.pop %v327
    %v344 = vrcp.pop %v328
    %346 = vset.pattern.permute.xlu0 16
    %347 = vperm.xlu0 %346, %v329
    %v348 = vpop.permute.xlu0 %347
    %351 = vset.pattern.permute.xlu0 16
    %352 = vperm.xlu0 %351, %v330
    %v353 = vpop.permute.xlu0 %352
    %356 = vset.pattern.permute.xlu0 16
    %357 = vperm.xlu0 %356, %v331
    %v358 = vpop.permute.xlu0 %357
    %361 = vset.pattern.permute.xlu0 16
    %362 = vperm.xlu0 %361, %v332
    %v363 = vpop.permute.xlu0 %362
    %366 = vset.pattern.permute.xlu0 16
    %367 = vperm.xlu0 %366, %v333
    %v368 = vpop.permute.xlu0 %367
    %371 = vset.pattern.permute.xlu0 16
    %372 = vperm.xlu0 %371, %v334
    %v373 = vpop.permute.xlu0 %372
    %376 = vset.pattern.permute.xlu0 16
    %377 = vperm.xlu0 %376, %v335
    %v378 = vpop.permute.xlu0 %377
    %381 = vset.pattern.permute.xlu0 16
    %382 = vperm.xlu0 %381, %v336
    %v383 = vpop.permute.xlu0 %382
    %386 = vset.pattern.permute.xlu0 16
    %387 = vperm.xlu0 %386, %v337
    %v388 = vpop.permute.xlu0 %387
    %391 = vset.pattern.permute.xlu0 16
    %392 = vperm.xlu0 %391, %v338
    %v393 = vpop.permute.xlu0 %392
    %396 = vset.pattern.permute.xlu0 16
    %397 = vperm.xlu0 %396, %v339
    %v398 = vpop.permute.xlu0 %397
    %401 = vset.pattern.permute.xlu0 16
    %402 = vperm.xlu0 %401, %v340
    %v403 = vpop.permute.xlu0 %402
    %406 = vset.pattern.permute.xlu0 16
    %407 = vperm.xlu0 %406, %v341
    %v408 = vpop.permute.xlu0 %407
    %411 = vset.pattern.permute.xlu0 16
    %412 = vperm.xlu0 %411, %v342
    %v413 = vpop.permute.xlu0 %412
    %416 = vset.pattern.permute.xlu0 16
    %417 = vperm.xlu0 %416, %v343
    %v418 = vpop.permute.xlu0 %417
    %421 = vset.pattern.permute.xlu0 16
    %422 = vperm.xlu0 %421, %v344
    %v423 = vpop.permute.xlu0 %422
    %v425 = vmul.f32 %v348, %v297
    %v426 = vmul.f32 %v353, %v298
    %v427 = vmul.f32 %v358, %v299
    %v428 = vmul.f32 %v363, %v300
    %v429 = vmul.f32 %v368, %v301
    %v430 = vmul.f32 %v373, %v302
    %v431 = vmul.f32 %v378, %v303
    %v432 = vmul.f32 %v383, %v304
    %v433 = vmul.f32 %v388, %v305
    %v434 = vmul.f32 %v393, %v306
    %v435 = vmul.f32 %v398, %v307
    %v436 = vmul.f32 %v403, %v308
    %v437 = vmul.f32 %v408, %v309
    %v438 = vmul.f32 %v413, %v310
    %v439 = vmul.f32 %v418, %v311
    %v440 = vmul.f32 %v423, %v312
    %v441 = vpack.c.bf16 %v426, %v425
    %v442 = vpack.c.bf16 %v428, %v427
    %v443 = vpack.c.bf16 %v430, %v429
    %v444 = vpack.c.bf16 %v432, %v431
    %v445 = vpack.c.bf16 %v434, %v433
    %v446 = vpack.c.bf16 %v436, %v435
    %v447 = vpack.c.bf16 %v438, %v437
    %v448 = vpack.c.bf16 %v440, %v439
    %v449 = vld [vmem:[%s3] sm:$0xf]
    %v450 = vld [vmem:[%s3 + $0x4] sm:$0xf]
    %v451 = vld [vmem:[%s3 + $0x8] sm:$0xf]
    %v452 = vld [vmem:[%s3 + $0xc] sm:$0xf]
    %v453 = vld [vmem:[%s3 + $0x10] sm:$0xf]
    %v454 = vld [vmem:[%s3 + $0x14] sm:$0xf]
    %v455 = vld [vmem:[%s3 + $0x18] sm:$0xf]
    %v456 = vld [vmem:[%s3 + $0x1c] sm:$0xf]
    %v457 = vld [vmem:[%s3 + $0x20] sm:$0xf]
    %v458 = vld [vmem:[%s3 + $0x24] sm:$0xf]
    %v459 = vld [vmem:[%s3 + $0x28] sm:$0xf]
    %v460 = vld [vmem:[%s3 + $0x2c] sm:$0xf]
    %v461 = vld [vmem:[%s3 + $0x30] sm:$0xf]
    %v462 = vld [vmem:[%s3 + $0x34] sm:$0xf]
    %v463 = vld [vmem:[%s3 + $0x38] sm:$0xf]
    %v464 = vld [vmem:[%s3 + $0x3c] sm:$0xf]
    %v465 = vld [vmem:[%s4] sm:$0x1]
    %v467 = vlaneseq
    %v468 = vshrl.u32 %v467, 7
    %v469 = vsub.s32 0, %v468
    %v470 = vrot.slane %v465, %v469
    %v488 = vunpack.c.l.b16 %v449
    %v489 = vunpack.c.l.b16 %v450
    %v490 = vunpack.c.l.b16 %v451
    %v491 = vunpack.c.l.b16 %v452
    %v492 = vunpack.c.l.b16 %v453
    %v493 = vunpack.c.l.b16 %v454
    %v494 = vunpack.c.l.b16 %v455
    %v495 = vunpack.c.l.b16 %v456
    %v496 = vunpack.c.l.b16 %v457
    %v497 = vunpack.c.l.b16 %v458
    %v498 = vunpack.c.l.b16 %v459
    %v499 = vunpack.c.l.b16 %v460
    %v500 = vunpack.c.l.b16 %v461
    %v501 = vunpack.c.l.b16 %v462
    %v502 = vunpack.c.l.b16 %v463
    %v503 = vunpack.c.l.b16 %v464
    %v504 = vpack.c.b16 %v489, %v488
    %v505 = vpack.c.b16 %v491, %v490
    %v506 = vpack.c.b16 %v493, %v492
    %v507 = vpack.c.b16 %v495, %v494
    %v508 = vpack.c.b16 %v497, %v496
    %v509 = vpack.c.b16 %v499, %v498
    %v510 = vpack.c.b16 %v501, %v500
    %v511 = vpack.c.b16 %v503, %v502
    %520 = vmatprep.subr.bf16.mxu0 0
    %521 = vmatpush1.bf16.msra.mxu0 %v511
    %522 = vmatprep.subr.bf16.mxu0 0
    %523 = vmatpush1.bf16.msra.mxu0 %v510
    %524 = vmatprep.subr.bf16.mxu0 0
    %525 = vmatpush1.bf16.msra.mxu0 %v509
    %526 = vmatprep.subr.bf16.mxu0 0
    %527 = vmatpush1.bf16.msra.mxu0 %v508
    %528 = vmatprep.subr.bf16.mxu0 0
    %529 = vmatpush1.bf16.msra.mxu0 %v507
    %530 = vmatprep.subr.bf16.mxu0 0
    %531 = vmatpush1.bf16.msra.mxu0 %v506
    %532 = vmatprep.subr.bf16.mxu0 0
    %533 = vmatpush1.bf16.msra.mxu0 %v505
    %534 = vmatprep.subr.bf16.mxu0 0
    %535 = vmatpush1.bf16.msra.mxu0 %v504
    %536 = vmatprep.subr.bf16.mxu0 0
    %537 = vmatpush2.bf16.msra.mxu0 0
    %538 = vmatprep.subr.bf16.mxu0 0
    %539 = vmatpush2.bf16.msra.mxu0 0
    %540 = vmatprep.subr.bf16.mxu0 0
    %541 = vmatpush2.bf16.msra.mxu0 0
    %542 = vmatprep.subr.bf16.mxu0 0
    %543 = vmatpush2.bf16.msra.mxu0 0
    %544 = vmatprep.subr.bf16.mxu0 0
    %545 = vmatpush2.bf16.msra.mxu0 0
    %546 = vmatprep.subr.bf16.mxu0 0
    %547 = vmatpush2.bf16.msra.mxu0 0
    %548 = vmatprep.subr.bf16.mxu0 0
    %549 = vmatpush2.bf16.msra.mxu0 0
    %550 = vmatprep.subr.bf16.mxu0 0
    %551 = vmatpush2.bf16.msra.mxu0 0
    %552 = vmatprep.mubr.bf16.mxu0 0
    %553 = vmatmul.mubr.bf16.gmra.mxu0 %v441
    %v554 = vpop.f32.mrf.mxu0
    %v555 = vadd.f32 %v470, %v554
    %v556 = vpop.f32.mrf.mxu0
    %v557 = vpop.f32.mrf.mxu0
    %v558 = vadd.f32 %v470, %v557
    %v559 = vpop.f32.mrf.mxu0
    %560 = vmatprep.mubr.bf16.mxu0 0
    %561 = vmatmul.mubr.bf16.gmra.mxu0 %v442
    %v562 = vpop.f32.mrf.mxu0
    %v563 = vadd.f32 %v470, %v562
    %v564 = vpop.f32.mrf.mxu0
    %v565 = vpop.f32.mrf.mxu0
    %v566 = vadd.f32 %v470, %v565
    %v567 = vpop.f32.mrf.mxu0
    %568 = vmatprep.mubr.bf16.mxu0 0
    %569 = vmatmul.mubr.bf16.gmra.mxu0 %v443
    %v570 = vpop.f32.mrf.mxu0
    %v571 = vadd.f32 %v470, %v570
    %v572 = vpop.f32.mrf.mxu0
    %v573 = vpop.f32.mrf.mxu0
    %v574 = vadd.f32 %v470, %v573
    %v575 = vpop.f32.mrf.mxu0
    %576 = vmatprep.mubr.bf16.mxu0 0
    %577 = vmatmul.mubr.bf16.gmra.mxu0 %v444
    %v578 = vpop.f32.mrf.mxu0
    %v579 = vadd.f32 %v470, %v578
    %v580 = vpop.f32.mrf.mxu0
    %v581 = vpop.f32.mrf.mxu0
    %v582 = vadd.f32 %v470, %v581
    %v583 = vpop.f32.mrf.mxu0
    %584 = vmatprep.mubr.bf16.mxu0 0
    %585 = vmatmul.mubr.bf16.gmra.mxu0 %v445
    %v586 = vpop.f32.mrf.mxu0
    %v587 = vadd.f32 %v470, %v586
    %v588 = vpop.f32.mrf.mxu0
    %v589 = vpop.f32.mrf.mxu0
    %v590 = vadd.f32 %v470, %v589
    %v591 = vpop.f32.mrf.mxu0
    %592 = vmatprep.mubr.bf16.mxu0 0
    %593 = vmatmul.mubr.bf16.gmra.mxu0 %v446
    %v594 = vpop.f32.mrf.mxu0
    %v595 = vadd.f32 %v470, %v594
    %v596 = vpop.f32.mrf.mxu0
    %v597 = vpop.f32.mrf.mxu0
    %v598 = vadd.f32 %v470, %v597
    %v599 = vpop.f32.mrf.mxu0
    %600 = vmatprep.mubr.bf16.mxu0 0
    %601 = vmatmul.mubr.bf16.gmra.mxu0 %v447
    %v602 = vpop.f32.mrf.mxu0
    %v603 = vadd.f32 %v470, %v602
    %v604 = vpop.f32.mrf.mxu0
    %v605 = vpop.f32.mrf.mxu0
    %v606 = vadd.f32 %v470, %v605
    %v607 = vpop.f32.mrf.mxu0
    %608 = vmatprep.mubr.bf16.mxu0 0
    %609 = vmatmul.mubr.bf16.gmra.mxu0 %v448
    %v610 = vpop.f32.mrf.mxu0
    %v611 = vadd.f32 %v470, %v610
    %v612 = vpop.f32.mrf.mxu0
    %v613 = vpop.f32.mrf.mxu0
    %v614 = vadd.f32 %v470, %v613
    %v615 = vpop.f32.mrf.mxu0
    %616 = vdwg.mxu0
    %617 = vst [vmem:[%s5] sm:$0xff] %v555
    %618 = vst [vmem:[%s5 + $0x8] sm:$0xff] %v558
    %619 = vst [vmem:[%s5 + $0x10] sm:$0xff] %v563
    %620 = vst [vmem:[%s5 + $0x18] sm:$0xff] %v566
    %621 = vst [vmem:[%s5 + $0x20] sm:$0xff] %v571
    %622 = vst [vmem:[%s5 + $0x28] sm:$0xff] %v574
    %623 = vst [vmem:[%s5 + $0x30] sm:$0xff] %v579
    %624 = vst [vmem:[%s5 + $0x38] sm:$0xff] %v582
    %625 = vst [vmem:[%s5 + $0x40] sm:$0xff] %v587
    %626 = vst [vmem:[%s5 + $0x48] sm:$0xff] %v590
    %627 = vst [vmem:[%s5 + $0x50] sm:$0xff] %v595
    %628 = vst [vmem:[%s5 + $0x58] sm:$0xff] %v598
    %629 = vst [vmem:[%s5 + $0x60] sm:$0xff] %v603
    %630 = vst [vmem:[%s5 + $0x68] sm:$0xff] %v606
    %631 = vst [vmem:[%s5 + $0x70] sm:$0xff] %v611
    %632 = vst [vmem:[%s5 + $0x78] sm:$0xff] %v614
  $region29: #{graph_convolution.1} parent=0 // pred_fallthru
    _
  // Predicated region
  $region30: #{graph_convolution.1} parent=0 // pred_check
    _
  $region31: #{graph_convolution.1} parent=0 // pred_check_branch
    %634 = sbr.rel (0) target = $region33
  $region32: #{graph_convolution.1} parent=0 // pred_region
    _
  $region33: #{graph_convolution.1} parent=0 // pred_fallthru
    _
  // Predicated region
  $region34: #{graph_convolution.1} parent=0 // pred_check
    _
  $region35: #{graph_convolution.1} parent=0 // pred_check_branch
    %636 = sbr.rel (0) target = $region37
  $region36: #{graph_convolution.1} parent=0 // pred_region
    _
  $region37: #{graph_convolution.1} parent=0 // pred_fallthru
    _

</llo_original>
